<compile_context>
chip_gen: v6e
topology: v6e:2x2x1
jax: 0.10.0
libtpu: 0.0.40
codegen_flags: <defaults>
</compile_context>

<pallas_src>
import math

import jax
import jax.numpy as jnp
from jax.experimental import pallas as pl
from jax.experimental.pallas import tpu as pltpu

HIDDEN = 128            # d_model (multiple of 128 -> lane dense)
NHEAD = 8
HEAD_DIM = HIDDEN // NHEAD
FFN_DIM = 2048          # nn.TransformerDecoderLayer default dim_feedforward
CTX_DIM = 768           # ViT feature dim fixed by the module
VOCAB = 256
N_LAYERS = 2            # n_transformer_layers (exercises decoder_layer1 + decoder_layerN)
LN_EPS = 1e-5
NEG_INF = -1e30         # additive mask value; masked softmax probs underflow to exactly 0


# ----------------------------- in-kernel helpers -----------------------------

def _layer_norm(x, g, b):
    mu = jnp.mean(x, axis=-1, keepdims=True)
    xc = x - mu
    var = jnp.mean(xc * xc, axis=-1, keepdims=True)
    return xc * jax.lax.rsqrt(var + LN_EPS) * g + b


def _mha(q_in, kv_in, wq, bq, wkv, bkv, wo, bo, mask):
    """Multi-head attention.  q_in (S,H), kv_in (L,H) f32; weights bf16; biases f32."""
    h_dim = q_in.shape[-1]
    scale = 1.0 / math.sqrt(HEAD_DIM)
    q = jnp.dot(q_in.astype(jnp.bfloat16), wq, preferred_element_type=jnp.float32) + bq
    kv = jnp.dot(kv_in.astype(jnp.bfloat16), wkv, preferred_element_type=jnp.float32) + bkv
    k, v = kv[:, :h_dim], kv[:, h_dim:]

    out = jnp.zeros_like(q_in)                 # (S, H) f32 accumulator
    for h in range(NHEAD):                     # unrolled, all in VMEM / vregs
        sl = slice(h * HEAD_DIM, (h + 1) * HEAD_DIM)
        qh, kh, vh = q[:, sl], k[:, sl], v[:, sl]
        s = jnp.einsum('qd,kd->qk', qh.astype(jnp.bfloat16), kh.astype(jnp.bfloat16),
                       preferred_element_type=jnp.float32) * scale
        if mask is not None:
            s = s + mask
        s = s - jnp.max(s, axis=-1, keepdims=True)
        p = jnp.exp(s)
        p = p / jnp.sum(p, axis=-1, keepdims=True)
        ctx = jnp.dot(p.astype(jnp.bfloat16), vh.astype(jnp.bfloat16),
                      preferred_element_type=jnp.float32)                 # (S, HEAD_DIM)
        out = out + jnp.dot(ctx.astype(jnp.bfloat16), wo[sl, :],
                            preferred_element_type=jnp.float32)           # (S, H)
    return out + bo


# --------------------------------- kernels -----------------------------------

def _decoder_layer_kernel(
        x_ref, mem_ref, mask_ref,
        sa_wq, sa_bq, sa_wkv, sa_bkv, sa_wo, sa_bo, ln1_g, ln1_b,
        ca_wq, ca_bq, ca_wkv, ca_bkv, ca_wo, ca_bo, ln2_g, ln2_b,
        w1, b1, w2, b2, ln3_g, ln3_b,
        o_ref):
    # One fused TransformerDecoderLayer for one batch element (grid over batch).
    x = x_ref[0]                      # (S, H) f32
    mem = mem_ref[0]                  # (L, H) f32 projected context
    mask = mask_ref[...]              # (S, S) additive causal mask

    # causal self-attention -> residual -> LayerNorm
    sa = _mha(x, x, sa_wq[...], sa_bq[...], sa_wkv[...], sa_bkv[...],
              sa_wo[...], sa_bo[...], mask)
    x = _layer_norm(x + sa, ln1_g[...], ln1_b[...])

    # cross-attention over ViT context -> residual -> LayerNorm
    ca = _mha(x, mem, ca_wq[...], ca_bq[...], ca_wkv[...], ca_bkv[...],
              ca_wo[...], ca_bo[...], None)
    x = _layer_norm(x + ca, ln2_g[...], ln2_b[...])

    # feed-forward (ReLU) -> residual -> LayerNorm
    hmid = jnp.dot(x.astype(jnp.bfloat16), w1[...],
                   preferred_element_type=jnp.float32) + b1[...]
    hmid = jnp.maximum(hmid, 0.0)
    ff = jnp.dot(hmid.astype(jnp.bfloat16), w2[...],
                 preferred_element_type=jnp.float32) + b2[...]
    x = _layer_norm(x + ff, ln3_g[...], ln3_b[...])

    o_ref[0] = x


def _linear_kernel(x_ref, w_ref, b_ref, o_ref):
    o_ref[...] = (jnp.dot(x_ref[...].astype(jnp.bfloat16), w_ref[...],
                          preferred_element_type=jnp.float32) + b_ref[...])


def _embed_posenc_kernel(ids_ref, emb_ref, pe_ref, o_ref):
    # Exact embedding lookup as a one-hot MXU matmul (f32), plus positional encoding.
    ids = ids_ref[...]                                          # (M, 1) int32
    vocab = emb_ref.shape[0]
    cols = jax.lax.broadcasted_iota(jnp.int32, (ids.shape[0], vocab), 1)
    onehot = (cols == ids).astype(jnp.float32)
    o_ref[...] = (jnp.dot(onehot, emb_ref[...], preferred_element_type=jnp.float32)
                  + pe_ref[...])


# ------------------------------ thin wrappers ---------------------------------

def linear(x2d, w_bf16, b):
    m = x2d.shape[0]
    n = w_bf16.shape[1]
    return pl.pallas_call(
        _linear_kernel,
        out_shape=jax.ShapeDtypeStruct((m, n), jnp.float32),
    )(x2d, w_bf16, b)


def embed_posenc(ids_col, emb, pe_rows):
    m = ids_col.shape[0]
    h = emb.shape[1]
    return pl.pallas_call(
        _embed_posenc_kernel,
        out_shape=jax.ShapeDtypeStruct((m, h), jnp.float32),
    )(ids_col, emb, pe_rows)


_LAYER_PARAM_ORDER = (
    'sa_wq', 'sa_bq', 'sa_wkv', 'sa_bkv', 'sa_wo', 'sa_bo', 'ln1_g', 'ln1_b',
    'ca_wq', 'ca_bq', 'ca_wkv', 'ca_bkv', 'ca_wo', 'ca_bo', 'ln2_g', 'ln2_b',
    'w1', 'b1', 'w2', 'b2', 'ln3_g', 'ln3_b')


def decoder_layer(x, mem, mask, lp):
    b, s, h = x.shape
    l = mem.shape[1]
    weights = [lp[k] for k in _LAYER_PARAM_ORDER]

    def _const_spec(a):
        nd = a.ndim
        return pl.BlockSpec(a.shape, lambda i, _nd=nd: (0,) * _nd)

    in_specs = ([pl.BlockSpec((1, s, h), lambda i: (i, 0, 0)),
                 pl.BlockSpec((1, l, h), lambda i: (i, 0, 0)),
                 pl.BlockSpec((s, s), lambda i: (0, 0))]
                + [_const_spec(w) for w in weights])

    return pl.pallas_call(
        _decoder_layer_kernel,
        out_shape=jax.ShapeDtypeStruct((b, s, h), jnp.float32),
        grid=(b,),
        in_specs=in_specs,
        out_specs=pl.BlockSpec((1, s, h), lambda i: (i, 0, 0)),
        compiler_params=pltpu.CompilerParams(
            dimension_semantics=("parallel",)),   # batch elements split across TCs (v7x)
    )(x, mem, mask, *weights)


# ------------------------------- parameters -----------------------------------

def make_positional_encoding(max_len, d_model):
    position = jnp.arange(max_len, dtype=jnp.float32)[:, None]
    div_term = jnp.exp(jnp.arange(0, d_model, 2, dtype=jnp.float32)
                       * (-math.log(10000.0) / d_model))
    ang = position * div_term
    pe = jnp.zeros((max_len, d_model), jnp.float32)
    pe = pe.at[:, 0::2].set(jnp.sin(ang))
    pe = pe.at[:, 1::2].set(jnp.cos(ang))
    return pe


def make_params(key):
    counter = [0]

    def nxt():
        counter[0] += 1
        return jax.random.fold_in(key, counter[0])

    def dense(fan_in, shape):
        w = jax.random.normal(nxt(), shape, jnp.float32) / math.sqrt(fan_in)
        return w.astype(jnp.bfloat16)      # matmul operands stored bf16 (f32 accumulate)

    def vec(n, scale=0.02):
        return scale * jax.random.normal(nxt(), (1, n), jnp.float32)

    p = {
        'emb': jax.random.normal(nxt(), (VOCAB, HIDDEN), jnp.float32),  # pretrained_embeddings
        'ctx_w': dense(CTX_DIM, (CTX_DIM, HIDDEN)),
        'ctx_b': vec(HIDDEN),
        'out_w': dense(HIDDEN, (HIDDEN, VOCAB)),
        'out_b': vec(VOCAB),
    }
    layers = []
    for _ in range(N_LAYERS):
        layers.append({
            'sa_wq': dense(HIDDEN, (HIDDEN, HIDDEN)), 'sa_bq': vec(HIDDEN),
            'sa_wkv': dense(HIDDEN, (HIDDEN, 2 * HIDDEN)), 'sa_bkv': vec(2 * HIDDEN),
            'sa_wo': dense(HIDDEN, (HIDDEN, HIDDEN)), 'sa_bo': vec(HIDDEN),
            'ln1_g': jnp.ones((1, HIDDEN), jnp.float32),
            'ln1_b': jnp.zeros((1, HIDDEN), jnp.float32),
            'ca_wq': dense(HIDDEN, (HIDDEN, HIDDEN)), 'ca_bq': vec(HIDDEN),
            'ca_wkv': dense(HIDDEN, (HIDDEN, 2 * HIDDEN)), 'ca_bkv': vec(2 * HIDDEN),
            'ca_wo': dense(HIDDEN, (HIDDEN, HIDDEN)), 'ca_bo': vec(HIDDEN),
            'ln2_g': jnp.ones((1, HIDDEN), jnp.float32),
            'ln2_b': jnp.zeros((1, HIDDEN), jnp.float32),
            'w1': dense(HIDDEN, (HIDDEN, FFN_DIM)), 'b1': vec(FFN_DIM),
            'w2': dense(FFN_DIM, (FFN_DIM, HIDDEN)), 'b2': vec(HIDDEN),
            'ln3_g': jnp.ones((1, HIDDEN), jnp.float32),
            'ln3_b': jnp.zeros((1, HIDDEN), jnp.float32),
        })
    p['layers'] = layers
    return p


# --------------------------------- forward ------------------------------------

def xray_vit_decoder_forward(params, token_ids, context, pe):
    b, s = token_ids.shape
    l = context.shape[1]
    h = params['emb'].shape[1]
    v = params['emb'].shape[0]

    # generate_square_subsequent_mask(S): 0 on/below diagonal, -inf above.
    idx = jnp.arange(s)
    mask = jnp.where(idx[None, :] <= idx[:, None], 0.0, NEG_INF).astype(jnp.float32)

    # context_to_hidden: (B, L, 768) -> (B, L, H)
    mem = linear(context.reshape(b * l, CTX_DIM).astype(jnp.float32),
                 params['ctx_w'], params['ctx_b']).reshape(b, l, h)

    # embedding + positional encoding (reference adds pe[:batch], broadcast over seq)
    pe_rows = jnp.repeat(pe[:b, :], s, axis=0)                     # (B*S, H)
    x = embed_posenc(token_ids.reshape(b * s, 1).astype(jnp.int32),
                     params['emb'], pe_rows).reshape(b, s, h)

    # decoder_layer1 followed by the (n_transformer_layers - 1) stacked layers
    for lp in params['layers']:
        x = decoder_layer(x, mem, mask, lp)

    # final vocabulary projection (raw logits, as in the reference)
    logits = linear(x.reshape(b * s, h), params['out_w'], params['out_b'])
    return logits.reshape(b, s, v)


# ----------------------------------- main --------------------------------------

if __name__ == "__main__":
    key = jax.random.PRNGKey(0)
    B, S, L_CTX = 2, 8, 8

    params = make_params(jax.random.fold_in(key, 1))
    pe = make_positional_encoding(64, HIDDEN)
    token_ids = jax.random.randint(jax.random.fold_in(key, 2), (B, S), 0, VOCAB,
                                   dtype=jnp.int32)
    context = jax.random.normal(jax.random.fold_in(key, 3), (B, L_CTX, CTX_DIM),
                                jnp.float32)

    out = xray_vit_decoder_forward(params, token_ids, context, pe)
    out = jax.block_until_ready(out)

    assert out.shape == (B, S, VOCAB), out.shape
    assert bool(jnp.all(jnp.isfinite(out)))
    print("KERNEL_OK")
</pallas_src>

<mosaic_0001>
module attributes {stable_mosaic.version = 11 : i64} {
  func.func @_linear_kernel(%arg0: memref<16x768xf32, #tpu.memory_space<vmem>>, %arg1: memref<768x128xbf16, #tpu.memory_space<vmem>>, %arg2: memref<1x128xf32, #tpu.memory_space<vmem>>, %arg3: memref<16x128xf32, #tpu.memory_space<vmem>>) attributes {dimension_semantics = [], scalar_prefetch = 0 : i64, scratch_operands = 0 : i64, tpu.core_type = #tpu.core_type<tc>} {
    %c0 = arith.constant 0 : index
    %c0_0 = arith.constant 0 : index
    %0 = vector.load %arg0[%c0, %c0_0] : memref<16x768xf32, #tpu.memory_space<vmem>>, vector<16x768xf32>
    %1 = arith.truncf %0 : vector<16x768xf32> to vector<16x768xbf16>
    %c0_1 = arith.constant 0 : index
    %c0_2 = arith.constant 0 : index
    %2 = vector.load %arg1[%c0_1, %c0_2] : memref<768x128xbf16, #tpu.memory_space<vmem>>, vector<768x128xbf16>
    %cst = arith.constant dense<0.000000e+00> : vector<16x128xf32>
    %3 = tpu.matmul %1, %2, %cst {dimension_numbers = #tpu.dot_dimension_numbers<[1], [0], [0], [1], [0, 0, 1, 1], [], []>} : vector<16x768xbf16>, vector<768x128xbf16>, vector<16x128xf32> -> vector<16x128xf32>
    %c0_3 = arith.constant 0 : index
    %c0_4 = arith.constant 0 : index
    %4 = vector.load %arg2[%c0_3, %c0_4] : memref<1x128xf32, #tpu.memory_space<vmem>>, vector<1x128xf32>
    %5 = vector.broadcast %4 : vector<1x128xf32> to vector<16x128xf32>
    %6 = arith.addf %3, %5 : vector<16x128xf32>
    %c0_5 = arith.constant 0 : index
    %c0_6 = arith.constant 0 : index
    %7 = vector.load %arg3[%c0_5, %c0_6] : memref<16x128xf32, #tpu.memory_space<vmem>>, vector<16x128xf32>
    tpu.vector_store %arg3[%c0_5, %c0_6], %6 {strides = array<i32>} : memref<16x128xf32, #tpu.memory_space<vmem>>, vector<16x128xf32>,
    return
  }
}

</mosaic_0001>

<llo_original>
// kernel: tpu_custom_call.1
$region0: #{tpu_custom_call.1}
  #allocation0 [shape = 'u32[]', space=smem, size = 0x4, offset = 0x4, fixed_abs, tag = 'smem constant byte address 0x4 - core index']
  #allocation1 [shape = 'u32[144,128]{1,0:T(1,128)}', space=vmem, size = 0x12000, scoped, tag = 'internal scratch']
  %s0 = inlined_call_operand.hbm [shape: f32[16,768], index: 0, kind: input, shape index: {}]
  %s1 = inlined_call_operand.hbm [shape: bf16[768,128], index: 1, kind: input, shape index: {}]
  %s2 = inlined_call_operand.vmem [shape: f32[1,128], index: 2, kind: input, shape index: {}]
  %s3 = inlined_call_operand.hbm [shape: f32[16,128], index: 3, kind: output, shape index: {}]
  %s4 = sld [smem:[#allocation0]]
  $region30: #{tpu_custom_call.1} parent=0
    _
  %s6 = ssub.s32 1, %s4
  %s7 = scalar_select 0, %s6, %s4
  $region1: #{tpu_custom_call.1} parent=0
    #allocation2 [shape = 'u8[49152]{0}', space=vmem, size = 0xc000, scoped, tag = 'input window, operand 0, single buffered']
    #allocation3 [shape = 's32[1]{0}', space=sflag, size = 0x4, scoped, tag = 'scoped memory for tpu_custom_call.1']
    #allocation4 [shape = 's32[1]{0}', space=sflag, size = 0x4, scoped, tag = 'scoped memory for tpu_custom_call.1']
    #allocation5 [shape = 'u8[196608]{0}', space=vmem, size = 0x30000, scoped, tag = 'input window, operand 1, single buffered']
    #allocation6 [shape = 's32[1]{0}', space=sflag, size = 0x4, scoped, tag = 'scoped memory for tpu_custom_call.1']
    #allocation7 [shape = 'u8[8192]{0}', space=vmem, size = 0x2000, scoped, tag = 'output window, operand 0, single buffered']
    %8 = vsyncpa [#allocation3], 0
    %9 = vsyncpa [#allocation6], 0
    %10 = vsyncpa [#allocation4], 0
    // Predicated region
    $region2: #{tpu_custom_call.1} parent=1 // pred_check
      _
    $region3: #{tpu_custom_call.1} parent=1 // pred_check_branch
      %12 = sbr.rel (0) target = $region5
    $region4: #{tpu_custom_call.1} parent=1 // pred_region
      %s14 = ssub.s32 1536, 1536
      %15 = vsyncadd [#allocation3], %s14
      %s16 = sshll.u32 [#allocation2], 4
      %s17 = int_to_ptr.vmem [resolvable:$true] %s16
      %22 = dma.hbm_to_vmem [thread:$0]  %s0, 1536, %s17, [#allocation3], 768, 768, 48
    $region5: #{tpu_custom_call.1} parent=1 // pred_fallthru
      _
    // Predicated region
    $region6: #{tpu_custom_call.1} parent=1 // pred_check
      _
    $region7: #{tpu_custom_call.1} parent=1 // pred_check_branch
      %24 = sbr.rel (0) target = $region9
    $region8: #{tpu_custom_call.1} parent=1 // pred_region
      %s26 = ssub.s32 6144, 6144
      %27 = vsyncadd [#allocation6], %s26
      %s28 = sshll.u32 [#allocation5], 4
      %s29 = int_to_ptr.vmem [resolvable:$true] %s28
      %34 = dma.hbm_to_vmem [thread:$0]  %s1, 6144, %s29, [#allocation6], 64, 64, 4
    $region9: #{tpu_custom_call.1} parent=1 // pred_fallthru
      _
    // Predicated region
    $region10: #{tpu_custom_call.1} parent=1 // pred_check
      _
    $region11: #{tpu_custom_call.1} parent=1 // pred_check_branch
      %36 = sbr.rel (0) target = $region13
    $region12: #{tpu_custom_call.1} parent=1 // pred_region
      _
    $region13: #{tpu_custom_call.1} parent=1 // pred_fallthru
      _
    // Predicated region
    $region14: #{tpu_custom_call.1} parent=1 // pred_check
      _
    $region15: #{tpu_custom_call.1} parent=1 // pred_check_branch
      %38 = sbr.rel (0) target = $region17
    $region16: #{tpu_custom_call.1} parent=1 // pred_region
      %39 = dma.done [#allocation3], 1536
    $region17: #{tpu_custom_call.1} parent=1 // pred_fallthru
      _
    // Predicated region
    $region18: #{tpu_custom_call.1} parent=1 // pred_check
      _
    $region19: #{tpu_custom_call.1} parent=1 // pred_check_branch
      %41 = sbr.rel (0) target = $region21
    $region20: #{tpu_custom_call.1} parent=1 // pred_region
      %42 = dma.done [#allocation6], 6144
    $region21: #{tpu_custom_call.1} parent=1 // pred_fallthru
      _
    %v44 = vld [vmem:[#allocation2] sm:$0xff]
    %v45 = vld [vmem:[#allocation2 + $0x8] sm:$0xff]
    %v46 = vld [vmem:[#allocation2 + $0x10] sm:$0xff]
    %v47 = vld [vmem:[#allocation2 + $0x18] sm:$0xff]
    %v48 = vld [vmem:[#allocation2 + $0x20] sm:$0xff]
    %v49 = vld [vmem:[#allocation2 + $0x28] sm:$0xff]
    %v50 = vld [vmem:[#allocation2 + $0x30] sm:$0xff]
    %v51 = vld [vmem:[#allocation2 + $0x38] sm:$0xff]
    %v52 = vld [vmem:[#allocation2 + $0x40] sm:$0xff]
    %v53 = vld [vmem:[#allocation2 + $0x48] sm:$0xff]
    %v54 = vld [vmem:[#allocation2 + $0x50] sm:$0xff]
    %v55 = vld [vmem:[#allocation2 + $0x58] sm:$0xff]
    %v56 = vpack.c.bf16 %v50, %v44
    %v57 = vpack.c.bf16 %v51, %v45
    %v58 = vpack.c.bf16 %v52, %v46
    %v59 = vpack.c.bf16 %v53, %v47
    %v60 = vpack.c.bf16 %v54, %v48
    %v61 = vpack.c.bf16 %v55, %v49
    %v62 = vld [vmem:[#allocation5] sm:$0xf]
    %v63 = vld [vmem:[#allocation5 + $0x4] sm:$0xf]
    %v64 = vld [vmem:[#allocation5 + $0x8] sm:$0xf]
    %v65 = vld [vmem:[#allocation5 + $0xc] sm:$0xf]
    %v66 = vld [vmem:[#allocation5 + $0x10] sm:$0xf]
    %v67 = vld [vmem:[#allocation5 + $0x14] sm:$0xf]
    %v68 = vld [vmem:[#allocation5 + $0x18] sm:$0xf]
    %v69 = vld [vmem:[#allocation5 + $0x1c] sm:$0xf]
    %v70 = vld [vmem:[#allocation5 + $0x20] sm:$0xf]
    %v71 = vld [vmem:[#allocation5 + $0x24] sm:$0xf]
    %v72 = vld [vmem:[#allocation5 + $0x28] sm:$0xf]
    %v73 = vld [vmem:[#allocation5 + $0x2c] sm:$0xf]
    %v74 = vld [vmem:[#allocation5 + $0x30] sm:$0xf]
    %v75 = vld [vmem:[#allocation5 + $0x34] sm:$0xf]
    %v76 = vld [vmem:[#allocation5 + $0x38] sm:$0xf]
    %v77 = vld [vmem:[#allocation5 + $0x3c] sm:$0xf]
    %v78 = vld [vmem:[#allocation5 + $0x40] sm:$0xf]
    %v79 = vld [vmem:[#allocation5 + $0x44] sm:$0xf]
    %v80 = vld [vmem:[#allocation5 + $0x48] sm:$0xf]
    %v81 = vld [vmem:[#allocation5 + $0x4c] sm:$0xf]
    %v82 = vld [vmem:[#allocation5 + $0x50] sm:$0xf]
    %v83 = vld [vmem:[#allocation5 + $0x54] sm:$0xf]
    %v84 = vld [vmem:[#allocation5 + $0x58] sm:$0xf]
    %v85 = vld [vmem:[#allocation5 + $0x5c] sm:$0xf]
    %v86 = vld [vmem:[#allocation5 + $0x60] sm:$0xf]
    %v87 = vld [vmem:[#allocation5 + $0x64] sm:$0xf]
    %v88 = vld [vmem:[#allocation5 + $0x68] sm:$0xf]
    %v89 = vld [vmem:[#allocation5 + $0x6c] sm:$0xf]
    %v90 = vld [vmem:[#allocation5 + $0x70] sm:$0xf]
    %v91 = vld [vmem:[#allocation5 + $0x74] sm:$0xf]
    %v92 = vld [vmem:[#allocation5 + $0x78] sm:$0xf]
    %v93 = vld [vmem:[#allocation5 + $0x7c] sm:$0xf]
    %v94 = vld [vmem:[#allocation5 + $0x80] sm:$0xf]
    %v95 = vld [vmem:[#allocation5 + $0x84] sm:$0xf]
    %v96 = vld [vmem:[#allocation5 + $0x88] sm:$0xf]
    %v97 = vld [vmem:[#allocation5 + $0x8c] sm:$0xf]
    %v98 = vld [vmem:[#allocation5 + $0x90] sm:$0xf]
    %v99 = vld [vmem:[#allocation5 + $0x94] sm:$0xf]
    %v100 = vld [vmem:[#allocation5 + $0x98] sm:$0xf]
    %v101 = vld [vmem:[#allocation5 + $0x9c] sm:$0xf]
    %v102 = vld [vmem:[#allocation5 + $0xa0] sm:$0xf]
    %v103 = vld [vmem:[#allocation5 + $0xa4] sm:$0xf]
    %v104 = vld [vmem:[#allocation5 + $0xa8] sm:$0xf]
    %v105 = vld [vmem:[#allocation5 + $0xac] sm:$0xf]
    %v106 = vld [vmem:[#allocation5 + $0xb0] sm:$0xf]
    %v107 = vld [vmem:[#allocation5 + $0xb4] sm:$0xf]
    %v108 = vld [vmem:[#allocation5 + $0xb8] sm:$0xf]
    %v109 = vld [vmem:[#allocation5 + $0xbc] sm:$0xf]
    %v110 = vld [vmem:[#allocation5 + $0xc0] sm:$0xf]
    %v111 = vld [vmem:[#allocation5 + $0xc4] sm:$0xf]
    %v112 = vld [vmem:[#allocation5 + $0xc8] sm:$0xf]
    %v113 = vld [vmem:[#allocation5 + $0xcc] sm:$0xf]
    %v114 = vld [vmem:[#allocation5 + $0xd0] sm:$0xf]
    %v115 = vld [vmem:[#allocation5 + $0xd4] sm:$0xf]
    %v116 = vld [vmem:[#allocation5 + $0xd8] sm:$0xf]
    %v117 = vld [vmem:[#allocation5 + $0xdc] sm:$0xf]
    %v118 = vld [vmem:[#allocation5 + $0xe0] sm:$0xf]
    %v119 = vld [vmem:[#allocation5 + $0xe4] sm:$0xf]
    %v120 = vld [vmem:[#allocation5 + $0xe8] sm:$0xf]
    %v121 = vld [vmem:[#allocation5 + $0xec] sm:$0xf]
    %v122 = vld [vmem:[#allocation5 + $0xf0] sm:$0xf]
    %v123 = vld [vmem:[#allocation5 + $0xf4] sm:$0xf]
    %v124 = vld [vmem:[#allocation5 + $0xf8] sm:$0xf]
    %v125 = vld [vmem:[#allocation5 + $0xfc] sm:$0xf]
    %v126 = vld [vmem:[#allocation5 + $0x100] sm:$0xf]
    %v127 = vld [vmem:[#allocation5 + $0x104] sm:$0xf]
    %v128 = vld [vmem:[#allocation5 + $0x108] sm:$0xf]
    %v129 = vld [vmem:[#allocation5 + $0x10c] sm:$0xf]
    %v130 = vld [vmem:[#allocation5 + $0x110] sm:$0xf]
    %v131 = vld [vmem:[#allocation5 + $0x114] sm:$0xf]
    %v132 = vld [vmem:[#allocation5 + $0x118] sm:$0xf]
    %v133 = vld [vmem:[#allocation5 + $0x11c] sm:$0xf]
    %v134 = vld [vmem:[#allocation5 + $0x120] sm:$0xf]
    %v135 = vld [vmem:[#allocation5 + $0x124] sm:$0xf]
    %v136 = vld [vmem:[#allocation5 + $0x128] sm:$0xf]
    %v137 = vld [vmem:[#allocation5 + $0x12c] sm:$0xf]
    %v138 = vld [vmem:[#allocation5 + $0x130] sm:$0xf]
    %v139 = vld [vmem:[#allocation5 + $0x134] sm:$0xf]
    %v140 = vld [vmem:[#allocation5 + $0x138] sm:$0xf]
    %v141 = vld [vmem:[#allocation5 + $0x13c] sm:$0xf]
    %v142 = vld [vmem:[#allocation5 + $0x140] sm:$0xf]
    %v143 = vld [vmem:[#allocation5 + $0x144] sm:$0xf]
    %v144 = vld [vmem:[#allocation5 + $0x148] sm:$0xf]
    %v145 = vld [vmem:[#allocation5 + $0x14c] sm:$0xf]
    %v146 = vld [vmem:[#allocation5 + $0x150] sm:$0xf]
    %v147 = vld [vmem:[#allocation5 + $0x154] sm:$0xf]
    %v148 = vld [vmem:[#allocation5 + $0x158] sm:$0xf]
    %v149 = vld [vmem:[#allocation5 + $0x15c] sm:$0xf]
    %v150 = vld [vmem:[#allocation5 + $0x160] sm:$0xf]
    %v151 = vld [vmem:[#allocation5 + $0x164] sm:$0xf]
    %v152 = vld [vmem:[#allocation5 + $0x168] sm:$0xf]
    %v153 = vld [vmem:[#allocation5 + $0x16c] sm:$0xf]
    %v154 = vld [vmem:[#allocation5 + $0x170] sm:$0xf]
    %v155 = vld [vmem:[#allocation5 + $0x174] sm:$0xf]
    %v156 = vld [vmem:[#allocation5 + $0x178] sm:$0xf]
    %v157 = vld [vmem:[#allocation5 + $0x17c] sm:$0xf]
    %v158 = vld [vmem:[%s2] sm:$0x1]
    %v160 = vlaneseq
    %v161 = vshrl.u32 %v160, 7
    %v162 = vsub.s32 0, %v161
    %v163 = vrot.slane %v158, %v162
    %v261 = vunpack.c.l.b16 %v62
    %v262 = vunpack.c.l.b16 %v63
    %v263 = vunpack.c.l.b16 %v64
    %v264 = vunpack.c.l.b16 %v65
    %v265 = vunpack.c.l.b16 %v66
    %v266 = vunpack.c.l.b16 %v67
    %v267 = vunpack.c.l.b16 %v68
    %v268 = vunpack.c.l.b16 %v69
    %v269 = vunpack.c.l.b16 %v70
    %v270 = vunpack.c.l.b16 %v71
    %v271 = vunpack.c.l.b16 %v72
    %v272 = vunpack.c.l.b16 %v73
    %v273 = vunpack.c.l.b16 %v74
    %v274 = vunpack.c.l.b16 %v75
    %v275 = vunpack.c.l.b16 %v76
    %v276 = vunpack.c.l.b16 %v77
    %v277 = vunpack.c.l.b16 %v78
    %v278 = vunpack.c.l.b16 %v79
    %v279 = vunpack.c.l.b16 %v80
    %v280 = vunpack.c.l.b16 %v81
    %v281 = vunpack.c.l.b16 %v82
    %v282 = vunpack.c.l.b16 %v83
    %v283 = vunpack.c.l.b16 %v84
    %v284 = vunpack.c.l.b16 %v85
    %v285 = vunpack.c.l.b16 %v86
    %v286 = vunpack.c.l.b16 %v87
    %v287 = vunpack.c.l.b16 %v88
    %v288 = vunpack.c.l.b16 %v89
    %v289 = vunpack.c.l.b16 %v90
    %v290 = vunpack.c.l.b16 %v91
    %v291 = vunpack.c.l.b16 %v92
    %v292 = vunpack.c.l.b16 %v93
    %v293 = vunpack.c.l.b16 %v94
    %v294 = vunpack.c.l.b16 %v95
    %v295 = vunpack.c.l.b16 %v96
    %v296 = vunpack.c.l.b16 %v97
    %v297 = vunpack.c.l.b16 %v98
    %v298 = vunpack.c.l.b16 %v99
    %v299 = vunpack.c.l.b16 %v100
    %v300 = vunpack.c.l.b16 %v101
    %v301 = vunpack.c.l.b16 %v102
    %v302 = vunpack.c.l.b16 %v103
    %v303 = vunpack.c.l.b16 %v104
    %v304 = vunpack.c.l.b16 %v105
    %v305 = vunpack.c.l.b16 %v106
    %v306 = vunpack.c.l.b16 %v107
    %v307 = vunpack.c.l.b16 %v108
    %v308 = vunpack.c.l.b16 %v109
    %v309 = vunpack.c.l.b16 %v110
    %v310 = vunpack.c.l.b16 %v111
    %v311 = vunpack.c.l.b16 %v112
    %v312 = vunpack.c.l.b16 %v113
    %v313 = vunpack.c.l.b16 %v114
    %v314 = vunpack.c.l.b16 %v115
    %v315 = vunpack.c.l.b16 %v116
    %v316 = vunpack.c.l.b16 %v117
    %v317 = vunpack.c.l.b16 %v118
    %v318 = vunpack.c.l.b16 %v119
    %v319 = vunpack.c.l.b16 %v120
    %v320 = vunpack.c.l.b16 %v121
    %v321 = vunpack.c.l.b16 %v122
    %v322 = vunpack.c.l.b16 %v123
    %v323 = vunpack.c.l.b16 %v124
    %v324 = vunpack.c.l.b16 %v125
    %v325 = vunpack.c.l.b16 %v126
    %v326 = vunpack.c.l.b16 %v127
    %v327 = vunpack.c.l.b16 %v128
    %v328 = vunpack.c.l.b16 %v129
    %v329 = vunpack.c.l.b16 %v130
    %v330 = vunpack.c.l.b16 %v131
    %v331 = vunpack.c.l.b16 %v132
    %v332 = vunpack.c.l.b16 %v133
    %v333 = vunpack.c.l.b16 %v134
    %v334 = vunpack.c.l.b16 %v135
    %v335 = vunpack.c.l.b16 %v136
    %v336 = vunpack.c.l.b16 %v137
    %v337 = vunpack.c.l.b16 %v138
    %v338 = vunpack.c.l.b16 %v139
    %v339 = vunpack.c.l.b16 %v140
    %v340 = vunpack.c.l.b16 %v141
    %v341 = vunpack.c.l.b16 %v142
    %v342 = vunpack.c.l.b16 %v143
    %v343 = vunpack.c.l.b16 %v144
    %v344 = vunpack.c.l.b16 %v145
    %v345 = vunpack.c.l.b16 %v146
    %v346 = vunpack.c.l.b16 %v147
    %v347 = vunpack.c.l.b16 %v148
    %v348 = vunpack.c.l.b16 %v149
    %v349 = vunpack.c.l.b16 %v150
    %v350 = vunpack.c.l.b16 %v151
    %v351 = vunpack.c.l.b16 %v152
    %v352 = vunpack.c.l.b16 %v153
    %v353 = vunpack.c.l.b16 %v154
    %v354 = vunpack.c.l.b16 %v155
    %v355 = vunpack.c.l.b16 %v156
    %v356 = vunpack.c.l.b16 %v157
    %v357 = vpack.c.b16 %v262, %v261
    %v358 = vpack.c.b16 %v264, %v263
    %v359 = vpack.c.b16 %v266, %v265
    %v360 = vpack.c.b16 %v268, %v267
    %v361 = vpack.c.b16 %v270, %v269
    %v362 = vpack.c.b16 %v272, %v271
    %v363 = vpack.c.b16 %v274, %v273
    %v364 = vpack.c.b16 %v276, %v275
    %v365 = vpack.c.b16 %v278, %v277
    %v366 = vpack.c.b16 %v280, %v279
    %v367 = vpack.c.b16 %v282, %v281
    %v368 = vpack.c.b16 %v284, %v283
    %v369 = vpack.c.b16 %v286, %v285
    %v370 = vpack.c.b16 %v288, %v287
    %v371 = vpack.c.b16 %v290, %v289
    %v372 = vpack.c.b16 %v292, %v291
    %v373 = vpack.c.b16 %v294, %v293
    %v374 = vpack.c.b16 %v296, %v295
    %v375 = vpack.c.b16 %v298, %v297
    %v376 = vpack.c.b16 %v300, %v299
    %v377 = vpack.c.b16 %v302, %v301
    %v378 = vpack.c.b16 %v304, %v303
    %v379 = vpack.c.b16 %v306, %v305
    %v380 = vpack.c.b16 %v308, %v307
    %v381 = vpack.c.b16 %v310, %v309
    %v382 = vpack.c.b16 %v312, %v311
    %v383 = vpack.c.b16 %v314, %v313
    %v384 = vpack.c.b16 %v316, %v315
    %v385 = vpack.c.b16 %v318, %v317
    %v386 = vpack.c.b16 %v320, %v319
    %v387 = vpack.c.b16 %v322, %v321
    %v388 = vpack.c.b16 %v324, %v323
    %v389 = vpack.c.b16 %v326, %v325
    %v390 = vpack.c.b16 %v328, %v327
    %v391 = vpack.c.b16 %v330, %v329
    %v392 = vpack.c.b16 %v332, %v331
    %v393 = vpack.c.b16 %v334, %v333
    %v394 = vpack.c.b16 %v336, %v335
    %v395 = vpack.c.b16 %v338, %v337
    %v396 = vpack.c.b16 %v340, %v339
    %v397 = vpack.c.b16 %v342, %v341
    %v398 = vpack.c.b16 %v344, %v343
    %v399 = vpack.c.b16 %v346, %v345
    %v400 = vpack.c.b16 %v348, %v347
    %v401 = vpack.c.b16 %v350, %v349
    %v402 = vpack.c.b16 %v352, %v351
    %v403 = vpack.c.b16 %v354, %v353
    %v404 = vpack.c.b16 %v356, %v355
    %453 = vmatprep.subr.bf16.mxu0 0
    %454 = vmatpush1.bf16.msra.mxu0 %v364
    %455 = vmatprep.subr.bf16.mxu0 0
    %456 = vmatpush1.bf16.msra.mxu0 %v363
    %457 = vmatprep.subr.bf16.mxu0 0
    %458 = vmatpush1.bf16.msra.mxu0 %v362
    %459 = vmatprep.subr.bf16.mxu0 0
    %460 = vmatpush1.bf16.msra.mxu0 %v361
    %461 = vmatprep.subr.bf16.mxu0 0
    %462 = vmatpush1.bf16.msra.mxu0 %v360
    %463 = vmatprep.subr.bf16.mxu0 0
    %464 = vmatpush1.bf16.msra.mxu0 %v359
    %465 = vmatprep.subr.bf16.mxu0 0
    %466 = vmatpush1.bf16.msra.mxu0 %v358
    %467 = vmatprep.subr.bf16.mxu0 0
    %468 = vmatpush1.bf16.msra.mxu0 %v357
    %469 = vmatprep.subr.bf16.mxu0 0
    %470 = vmatpush2.bf16.msra.mxu0 %v372
    %471 = vmatprep.subr.bf16.mxu0 0
    %472 = vmatpush2.bf16.msra.mxu0 %v371
    %473 = vmatprep.subr.bf16.mxu0 0
    %474 = vmatpush2.bf16.msra.mxu0 %v370
    %475 = vmatprep.subr.bf16.mxu0 0
    %476 = vmatpush2.bf16.msra.mxu0 %v369
    %477 = vmatprep.subr.bf16.mxu0 0
    %478 = vmatpush2.bf16.msra.mxu0 %v368
    %479 = vmatprep.subr.bf16.mxu0 0
    %480 = vmatpush2.bf16.msra.mxu0 %v367
    %481 = vmatprep.subr.bf16.mxu0 0
    %482 = vmatpush2.bf16.msra.mxu0 %v366
    %483 = vmatprep.subr.bf16.mxu0 0
    %484 = vmatpush2.bf16.msra.mxu0 %v365
    %485 = vmatprep.mubr.bf16.mxu0 %v57
    %486 = vmatmul.mubr.bf16.gmra.mxu0 %v56
    %v487 = vpop.f32.mrf.mxu0
    %v488 = vadd.f32 %v163, %v487
    %v489 = vpop.f32.mrf.mxu0
    %v490 = vpop.f32.mrf.mxu0
    %v491 = vadd.f32 %v163, %v490
    %v492 = vpop.f32.mrf.mxu0
    %493 = vdwg.mxu0
    %494 = vmatprep.subr.bf16.mxu0 0
    %495 = vmatpush1.bf16.msra.mxu0 %v380
    %496 = vmatprep.subr.bf16.mxu0 0
    %497 = vmatpush1.bf16.msra.mxu0 %v379
    %498 = vmatprep.subr.bf16.mxu0 0
    %499 = vmatpush1.bf16.msra.mxu0 %v378
    %500 = vmatprep.subr.bf16.mxu0 0
    %501 = vmatpush1.bf16.msra.mxu0 %v377
    %502 = vmatprep.subr.bf16.mxu0 0
    %503 = vmatpush1.bf16.msra.mxu0 %v376
    %504 = vmatprep.subr.bf16.mxu0 0
    %505 = vmatpush1.bf16.msra.mxu0 %v375
    %506 = vmatprep.subr.bf16.mxu0 0
    %507 = vmatpush1.bf16.msra.mxu0 %v374
    %508 = vmatprep.subr.bf16.mxu0 0
    %509 = vmatpush1.bf16.msra.mxu0 %v373
    %510 = vmatprep.subr.bf16.mxu0 0
    %511 = vmatpush2.bf16.msra.mxu0 %v388
    %512 = vmatprep.subr.bf16.mxu0 0
    %513 = vmatpush2.bf16.msra.mxu0 %v387
    %514 = vmatprep.subr.bf16.mxu0 0
    %515 = vmatpush2.bf16.msra.mxu0 %v386
    %516 = vmatprep.subr.bf16.mxu0 0
    %517 = vmatpush2.bf16.msra.mxu0 %v385
    %518 = vmatprep.subr.bf16.mxu0 0
    %519 = vmatpush2.bf16.msra.mxu0 %v384
    %520 = vmatprep.subr.bf16.mxu0 0
    %521 = vmatpush2.bf16.msra.mxu0 %v383
    %522 = vmatprep.subr.bf16.mxu0 0
    %523 = vmatpush2.bf16.msra.mxu0 %v382
    %524 = vmatprep.subr.bf16.mxu0 0
    %525 = vmatpush2.bf16.msra.mxu0 %v381
    %526 = vmatprep.mubr.bf16.mxu0 %v59
    %527 = vmatmul.mubr.bf16.gmra.mxu0 %v58
    %v528 = vpop.f32.mrf.mxu0
    %v529 = vadd.f32 %v488, %v528
    %v530 = vpop.f32.mrf.mxu0
    %v531 = vpop.f32.mrf.mxu0
    %v532 = vadd.f32 %v491, %v531
    %v533 = vpop.f32.mrf.mxu0
    %534 = vdwg.mxu0
    %535 = vmatprep.subr.bf16.mxu0 0
    %536 = vmatpush1.bf16.msra.mxu0 %v396
    %537 = vmatprep.subr.bf16.mxu0 0
    %538 = vmatpush1.bf16.msra.mxu0 %v395
    %539 = vmatprep.subr.bf16.mxu0 0
    %540 = vmatpush1.bf16.msra.mxu0 %v394
    %541 = vmatprep.subr.bf16.mxu0 0
    %542 = vmatpush1.bf16.msra.mxu0 %v393
    %543 = vmatprep.subr.bf16.mxu0 0
    %544 = vmatpush1.bf16.msra.mxu0 %v392
    %545 = vmatprep.subr.bf16.mxu0 0
    %546 = vmatpush1.bf16.msra.mxu0 %v391
    %547 = vmatprep.subr.bf16.mxu0 0
    %548 = vmatpush1.bf16.msra.mxu0 %v390
    %549 = vmatprep.subr.bf16.mxu0 0
    %550 = vmatpush1.bf16.msra.mxu0 %v389
    %551 = vmatprep.subr.bf16.mxu0 0
    %552 = vmatpush2.bf16.msra.mxu0 %v404
    %553 = vmatprep.subr.bf16.mxu0 0
    %554 = vmatpush2.bf16.msra.mxu0 %v403
    %555 = vmatprep.subr.bf16.mxu0 0
    %556 = vmatpush2.bf16.msra.mxu0 %v402
    %557 = vmatprep.subr.bf16.mxu0 0
    %558 = vmatpush2.bf16.msra.mxu0 %v401
    %559 = vmatprep.subr.bf16.mxu0 0
    %560 = vmatpush2.bf16.msra.mxu0 %v400
    %561 = vmatprep.subr.bf16.mxu0 0
    %562 = vmatpush2.bf16.msra.mxu0 %v399
    %563 = vmatprep.subr.bf16.mxu0 0
    %564 = vmatpush2.bf16.msra.mxu0 %v398
    %565 = vmatprep.subr.bf16.mxu0 0
    %566 = vmatpush2.bf16.msra.mxu0 %v397
    %567 = vmatprep.mubr.bf16.mxu0 %v61
    %568 = vmatmul.mubr.bf16.gmra.mxu0 %v60
    %v569 = vpop.f32.mrf.mxu0
    %v570 = vadd.f32 %v529, %v569
    %v571 = vpop.f32.mrf.mxu0
    %v572 = vpop.f32.mrf.mxu0
    %v573 = vadd.f32 %v532, %v572
    %v574 = vpop.f32.mrf.mxu0
    %575 = vdwg.mxu0
    %576 = vst [vmem:[#allocation7] sm:$0xff] %v570
    %577 = vst [vmem:[#allocation7 + $0x8] sm:$0xff] %v573
    // Predicated region
    $region22: #{tpu_custom_call.1} parent=1 // pred_check
      _
    $region23: #{tpu_custom_call.1} parent=1 // pred_check_branch
      %579 = sbr.rel (0) target = $region25
    $region24: #{tpu_custom_call.1} parent=1 // pred_region
      %s581 = ssub.s32 256, 256
      %582 = vsyncadd [#allocation4], %s581
      %s583 = sshll.u32 [#allocation7], 4
      %s584 = int_to_ptr.vmem [resolvable:$true] %s583
      %589 = dma.vmem_to_hbm [thread:$0]  %s584, 256, %s3, [#allocation4], 128, 128, 8
    $region25: #{tpu_custom_call.1} parent=1 // pred_fallthru
      _
    // Predicated region
    $region26: #{tpu_custom_call.1} parent=1 // pred_check
      _
    $region27: #{tpu_custom_call.1} parent=1 // pred_check_branch
      %591 = sbr.rel (0) target = $region29
    $region28: #{tpu_custom_call.1} parent=1 // pred_region
      %592 = dma.done [#allocation4], 256
    $region29: #{tpu_custom_call.1} parent=1 // pred_fallthru
      _
    %593 = vsyncpa [#allocation3], 1
    %594 = vsyncpa [#allocation6], 1
    %595 = vsyncpa [#allocation4], 1

</llo_original>
